<compile_context>
chip_gen: v6e
topology: v6e:2x2x1
jax: 0.10.0
libtpu: 0.0.40
codegen_flags: <defaults>
</compile_context>

<pallas_src>
import functools
import math

import jax
import jax.numpy as jnp
from jax.experimental import pallas as pl
from jax.experimental.pallas import tpu as pltpu


_TARGET_HBM_BYTES = 4 << 20   # per-grid-step streaming target (~0.35us/step overhead)
_VMEM_BUDGET = 32 << 20       # per-step working-set budget (v7x: 64 MiB physical/TC)
_VMEM_LIMIT_FLOOR = 16 << 20  # v5e's default scoped VMEM limit is small; always raise
_VMEM_LIMIT_CAP = 48 << 20    # stay well under v7x physical VMEM
_CHUNK_N_MIN = 8192           # chunk the class axis only for vocab-scale N


def _round_up(v, m):
    return -(-int(v) // int(m)) * int(m)


# ----------------------------------------------------------------------- kernels
def _dirichlet_kernel(scal_ref, am1_ref, x_ref, out_ref, *, lane_dense):
    """Whole-N kernel: one (tb, N) row tile per grid step."""
    # scal_ref: SMEM (2,)      [lgamma(sum a) - sum lgamma(a), sum(a - 1)]
    # am1_ref:  VMEM (1, N)    alpha - 1
    # x_ref:    VMEM (tb, N)   logits tile, native dtype
    # out_ref:  VMEM (1,1,tb) if lane_dense else (tb, 1)
    x = x_ref[...].astype(jnp.float32)                    # in-kernel upcast (v5e-safe)
    am1 = am1_ref[...]                                    # (1, N) f32
    m = jnp.max(x, axis=-1, keepdims=True)                # (tb, 1)
    p = x - m                                             # single shifted f32 temp
    se = jnp.sum(jnp.exp(p), axis=-1, keepdims=True)      # (tb, 1)
    wsum = jnp.sum(am1 * p, axis=-1, keepdims=True)       # sum((a-1)*(x-m)); both
    # term pieces are on shifted values -> no cancellation vs. the reference.
    logp = scal_ref[0] + wsum - scal_ref[1] * jnp.log(se)
    if lane_dense:
        # (tb,1) -> (1,1,tb) relayout rides the otherwise-idle XLU slot and turns the
        # output store into dense full-lane vst + one contiguous output DMA.
        out_ref[...] = logp.reshape(1, 1, logp.shape[0])
    else:
        out_ref[...] = logp


def _dirichlet_kernel_chunked(scal_ref, am1_ref, x_ref, out_ref,
                              m_acc, se_acc, w_acc, sp_acc, *, lane_dense):
    """Class-axis-chunked kernel (vocab-scale N): online logsumexp accumulators."""
    k = pl.program_id(1)

    @pl.when(k == 0)
    def _():
        m_acc[...] = jnp.full_like(m_acc, -1e30)   # finite: avoids 0*inf NaN on chunk 0
        se_acc[...] = jnp.zeros_like(se_acc)
        w_acc[...] = jnp.zeros_like(w_acc)
        sp_acc[...] = jnp.zeros_like(sp_acc)

    x = x_ref[...].astype(jnp.float32)             # (tb, cn)
    am1 = am1_ref[...]                             # (1, cn)
    m_old = m_acc[...]
    m_new = jnp.maximum(m_old, jnp.max(x, axis=-1, keepdims=True))
    p = x - m_new
    scale = jnp.exp(m_old - m_new)
    se_acc[...] = se_acc[...] * scale + jnp.sum(jnp.exp(p), axis=-1, keepdims=True)
    # Weighted sum kept relative to the running max (cancellation-free); rebase the
    # already-accumulated part when the max moves.  sp_acc = sum(am1) over chunks so far.
    w_acc[...] = (w_acc[...] + sp_acc[...] * (m_old - m_new)
                  + jnp.sum(am1 * p, axis=-1, keepdims=True))
    sp_acc[...] = sp_acc[...] + jnp.sum(am1)
    m_acc[...] = m_new

    @pl.when(k == pl.num_programs(1) - 1)
    def _():
        logp = scal_ref[0] + w_acc[...] - sp_acc[...] * jnp.log(se_acc[...])
        if lane_dense:
            out_ref[...] = logp.reshape(1, 1, logp.shape[0])
        else:
            out_ref[...] = logp


# ----------------------------------------------------------------- call builders
def _whole_n_call(n, tb, num_tiles, lane_dense, vmem_limit):
    kernel = functools.partial(_dirichlet_kernel, lane_dense=lane_dense)
    in_specs = [
        pl.BlockSpec(memory_space=pltpu.MemorySpace.SMEM),       # [term1, sum(a-1)]
        pl.BlockSpec((1, n), lambda i: (0, 0)),                  # alpha - 1 (resident)
        pl.BlockSpec((tb, n), lambda i: (i, 0)),                 # logits row tile
    ]
    if lane_dense:
        out_shape = jax.ShapeDtypeStruct((num_tiles, 1, tb), jnp.float32)
        out_specs = pl.BlockSpec((1, 1, tb), lambda i: (i, 0, 0))
    else:
        out_shape = jax.ShapeDtypeStruct((num_tiles * tb, 1), jnp.float32)
        out_specs = pl.BlockSpec((tb, 1), lambda i: (i, 0))
    return pl.pallas_call(
        kernel,
        grid=(num_tiles,),
        in_specs=in_specs,
        out_specs=out_specs,
        out_shape=out_shape,
        compiler_params=pltpu.CompilerParams(
            dimension_semantics=("parallel",),
            vmem_limit_bytes=vmem_limit),
    )


def _chunked_call(n, cn, tb, num_tiles, lane_dense, vmem_limit):
    kernel = functools.partial(_dirichlet_kernel_chunked, lane_dense=lane_dense)
    nk = n // cn
    in_specs = [
        pl.BlockSpec(memory_space=pltpu.MemorySpace.SMEM),
        pl.BlockSpec((1, cn), lambda i, k: (0, k)),
        pl.BlockSpec((tb, cn), lambda i, k: (i, k)),
    ]
    if lane_dense:
        out_shape = jax.ShapeDtypeStruct((num_tiles, 1, tb), jnp.float32)
        out_specs = pl.BlockSpec((1, 1, tb), lambda i, k: (i, 0, 0))
    else:
        out_shape = jax.ShapeDtypeStruct((num_tiles * tb, 1), jnp.float32)
        out_specs = pl.BlockSpec((tb, 1), lambda i, k: (i, 0))
    return pl.pallas_call(
        kernel,
        grid=(num_tiles, nk),
        in_specs=in_specs,
        out_specs=out_specs,
        out_shape=out_shape,
        scratch_shapes=[pltpu.VMEM((tb, 1), jnp.float32)] * 4,   # m, se, wsum, sum(am1)
        compiler_params=pltpu.CompilerParams(
            dimension_semantics=("parallel", "arbitrary"),
            vmem_limit_bytes=vmem_limit),
    )


@functools.lru_cache(maxsize=None)
def _lane_dense_ok(n, cn, tb, num_tiles, dtype_name, vmem_limit):
    """One-time (cached per tiling config) compile probe for the lane-dense output
    path.  Replaces the old per-call try/except + block_until_ready fallback: no
    per-call sync, jit-friendly, and real errors still surface at the real call."""
    try:
        if cn is None:
            call = _whole_n_call(n, tb, num_tiles, True, vmem_limit)
        else:
            call = _chunked_call(n, cn, tb, num_tiles, True, vmem_limit)
        args = (jax.ShapeDtypeStruct((2,), jnp.float32),
                jax.ShapeDtypeStruct((1, n), jnp.float32),
                jax.ShapeDtypeStruct((num_tiles * tb, n), jnp.dtype(dtype_name)))
        jax.jit(call).lower(*args).compile()
        return True
    except Exception:
        return False


# -------------------------------------------------------------------- tiling policy
def _choose_cn(n, itemsize):
    """Chunk the class axis only for vocab-scale N (keeps per-block VMEM bounded on
    v7x's 64 MiB while preserving large row tiles).  cn must divide n and be a
    multiple of 128 so no garbage lane ever enters a reduction."""
    del itemsize
    if n < _CHUNK_N_MIN or n % 128 != 0:
        return None
    for cand in (4096, 2048, 1024, 512, 256, 128):
        if n % cand == 0:
            return cand
    return None


def _choose_tb(b_flat, n_block, itemsize, sub):
    """Row-tile size.  Big blocks are the main lever for this HBM-streaming kernel:
    ~4 MiB of logits per grid step (per-step pipeline overhead ~0.35 us), bounded by
    a VMEM working-set budget that accounts for minor-dim padding to 128 lanes."""
    n_pad = _round_up(n_block, 128)
    per_row_vmem = 2 * n_pad * itemsize + 2 * n_pad * 4 + 16    # dbl-buf in + ~2 f32 temps
    tb_vmem = max(_VMEM_BUDGET // per_row_vmem, 1)
    tb_hbm = max(_TARGET_HBM_BYTES // (n_block * itemsize), 1)
    tb = min(tb_vmem, tb_hbm)
    b_r = _round_up(b_flat, sub)
    if b_r <= tb:
        return b_r                       # one tile covers the whole (rounded) batch
    if tb >= 128:
        tb = (tb // 128) * 128           # unmasked lane-dense output stores
    else:
        tb = max((tb // sub) * sub, sub)
    return tb


def _vmem_limit_bytes(tb, n_block, itemsize, n_scratch_cols=0):
    """Double-buffered input + ~2 f32 temporaries (+ scratch) + headroom, lane-padded;
    floored at 16 MiB (v5e default scoped limit), capped at 48 MiB (v7x-safe)."""
    n_pad = _round_up(n_block, 128)
    need = (2 * tb * n_pad * itemsize + 2 * tb * n_pad * 4
            + n_scratch_cols * tb * 128 * 4 + (2 << 20))
    return int(min(max(need, _VMEM_LIMIT_FLOOR), _VMEM_LIMIT_CAP))


# --------------------------------------------------------------------------- wrapper
def dirichlet_forward(logits, alpha, return_probs=False, tb=None, n_chunk=None):
    orig_shape = logits.shape
    n = int(orig_shape[-1])
    b_flat = int(math.prod(orig_shape[:-1])) if len(orig_shape) > 1 else 1
    if b_flat == 0:
        empty = jnp.zeros(orig_shape[:-1], jnp.float32)
        return jnp.exp(empty) if return_probs else empty
    x = logits.reshape(b_flat, n)        # native dtype: no wrapper-side f32 HBM pass

    # Parameter-only setup (lgamma etc.), done once in plain JAX outside the hot path.
    alpha_f = jnp.asarray(alpha, jnp.float32).reshape(-1)
    am1 = alpha_f - 1.0
    term1 = jax.lax.lgamma(jnp.sum(alpha_f)) - jnp.sum(jax.lax.lgamma(alpha_f))
    scalars = jnp.stack([term1, jnp.sum(am1)]).astype(jnp.float32)   # (2,) -> SMEM
    am1_2d = am1.reshape(1, n)

    itemsize = jnp.dtype(x.dtype).itemsize
    sub = max(8, 32 // itemsize)         # sublane multiple for this input dtype

    cn = _choose_cn(n, itemsize) if n_chunk is None else int(n_chunk)
    if cn is not None and (cn <= 0 or n % cn != 0 or cn % 128 != 0 or cn >= n):
        cn = None
    n_block = n if cn is None else cn

    if tb is None:
        tb = _choose_tb(b_flat, n_block, itemsize, sub)
    else:
        tb = max(sub, _round_up(int(tb), sub))
    num_tiles = pl.cdiv(b_flat, tb)      # final block may be partial -> no jnp.pad copy
    vmem_limit = _vmem_limit_bytes(tb, n_block, itemsize,
                                   n_scratch_cols=0 if cn is None else 4)

    lane_dense = _lane_dense_ok(n, cn, tb, num_tiles, jnp.dtype(x.dtype).name,
                                vmem_limit)
    if cn is None:
        call = _whole_n_call(n, tb, num_tiles, lane_dense, vmem_limit)
    else:
        call = _chunked_call(n, cn, tb, num_tiles, lane_dense, vmem_limit)

    out = call(scalars, am1_2d, x)
    logp = out.reshape(num_tiles * tb)[:b_flat].reshape(orig_shape[:-1])
    if return_probs:
        return jnp.exp(logp)
    return logp


# ------------------------------------------------------------------------- reference
def dirichlet_reference(logits, alpha, return_probs=False):
    a = jnp.asarray(alpha, jnp.float32).reshape(-1)
    lsmax = jax.nn.log_softmax(logits.astype(jnp.float32), axis=-1)
    term1 = jax.lax.lgamma(jnp.sum(a)) - jnp.sum(jax.lax.lgamma(a))
    term2 = jnp.sum((a - 1.0) * lsmax, axis=-1)
    logp = term1 + term2
    return jnp.exp(logp) if return_probs else logp


if __name__ == "__main__":
    key = jax.random.PRNGKey(0)
    k_alpha, k1, k2, k3 = jax.random.split(key, 4)

    n_classes = 32
    # Deterministic, non-trivial parameter init (module default would be ones).
    alpha = jax.random.uniform(k_alpha, (n_classes,), jnp.float32, minval=0.5, maxval=2.5)

    # Case 1: f32 logits, (batch=2, seq=8, n_classes=32), single row tile.
    logits1 = jax.random.normal(k1, (2, 8, n_classes), jnp.float32)
    out1 = jax.block_until_ready(dirichlet_forward(logits1, alpha))
    ref1 = dirichlet_reference(logits1, alpha)
    assert out1.shape == (2, 8)
    assert jnp.allclose(out1, ref1, atol=1e-4, rtol=1e-4), (
        f"logp mismatch: max abs err {jnp.max(jnp.abs(out1 - ref1))}")

    # return_probs path.
    probs1 = jax.block_until_ready(dirichlet_forward(logits1, alpha, return_probs=True))
    assert jnp.allclose(probs1, jnp.exp(ref1), rtol=2e-3), "probs mismatch"

    # Case 2: bf16 logits with a non-tile-multiple batch (3, 5): native-dtype streaming
    # and the partial final input block (no jnp.pad copy).
    logits2 = jax.random.normal(k2, (3, 5, n_classes), jnp.float32).astype(jnp.bfloat16)
    out2 = jax.block_until_ready(dirichlet_forward(logits2, alpha))
    ref2 = dirichlet_reference(logits2, alpha)
    assert out2.shape == (3, 5)
    assert jnp.allclose(out2, ref2, atol=1e-3, rtol=1e-3), (
        f"bf16 logp mismatch: max abs err {jnp.max(jnp.abs(out2 - ref2))}")

    # Case 3: multi row-tile + chunked class axis (forced small to keep shapes tiny):
    # exercises the online-logsumexp accumulator path used for vocab-scale N.
    n_big = 256
    alpha3 = jax.random.uniform(k_alpha, (n_big,), jnp.float32, minval=0.5, maxval=2.5)
    logits3 = jax.random.normal(k3, (2, 8, n_big), jnp.float32)
    out3 = jax.block_until_ready(dirichlet_forward(logits3, alpha3, tb=8, n_chunk=128))
    ref3 = dirichlet_reference(logits3, alpha3)
    assert out3.shape == (2, 8)
    assert jnp.allclose(out3, ref3, atol=1e-3, rtol=1e-3), (
        f"chunked logp mismatch: max abs err {jnp.max(jnp.abs(out3 - ref3))}")

    print("KERNEL_OK")
</pallas_src>

<mosaic_0001>
module attributes {stable_mosaic.version = 11 : i64} {
  func.func @_dirichlet_kernel(%arg0: i32, %arg1: memref<2xf32, #tpu.memory_space<smem>>, %arg2: memref<1x32xf32, #tpu.memory_space<vmem>>, %arg3: memref<16x32xf32, #tpu.memory_space<vmem>>, %arg4: memref<16x1xf32, #tpu.memory_space<vmem>>) attributes {dimension_semantics = [#tpu.dimension_semantics<parallel>], iteration_bounds = array<i64: 1>, scalar_prefetch = 0 : i64, scratch_operands = 0 : i64, tpu.core_type = #tpu.core_type<tc>, window_params = [{transform_indices = @transform_0, window_bounds = array<i64: 2>}, {pipeline_mode = #tpu.pipeline_mode<synchronous>, transform_indices = @transform_1, window_bounds = array<i64: 1, 32>}, {transform_indices = @transform_2, window_bounds = array<i64: 16, 32>}, {transform_indices = @transform_3, window_bounds = array<i64: 16, 1>}]} {
    %c0 = arith.constant 0 : index
    %c0_0 = arith.constant 0 : index
    %0 = vector.load %arg3[%c0, %c0_0] : memref<16x32xf32, #tpu.memory_space<vmem>>, vector<16x32xf32>
    %c0_1 = arith.constant 0 : index
    %c0_2 = arith.constant 0 : index
    %1 = vector.load %arg2[%c0_1, %c0_2] : memref<1x32xf32, #tpu.memory_space<vmem>>, vector<1x32xf32>
    %cst = arith.constant dense<0xFF800000> : vector<16xf32>
    %2 = vector.multi_reduction <maximumf>, %0, %cst [1] : vector<16x32xf32> to vector<16xf32>
    %3 = vector.shape_cast %2 : vector<16xf32> to vector<16x1xf32>
    %4 = vector.broadcast %3 : vector<16x1xf32> to vector<16x32xf32>
    %5 = arith.subf %0, %4 : vector<16x32xf32>
    %6 = math.exp %5 : vector<16x32xf32>
    %cst_3 = arith.constant dense<0.000000e+00> : vector<16xf32>
    %7 = vector.multi_reduction <add>, %6, %cst_3 [1] : vector<16x32xf32> to vector<16xf32>
    %8 = vector.shape_cast %7 : vector<16xf32> to vector<16x1xf32>
    %9 = vector.broadcast %1 : vector<1x32xf32> to vector<16x32xf32>
    %10 = arith.mulf %9, %5 : vector<16x32xf32>
    %cst_4 = arith.constant dense<0.000000e+00> : vector<16xf32>
    %11 = vector.multi_reduction <add>, %10, %cst_4 [1] : vector<16x32xf32> to vector<16xf32>
    %12 = vector.shape_cast %11 : vector<16xf32> to vector<16x1xf32>
    %c0_5 = arith.constant 0 : index
    %13 = memref.load %arg1[%c0_5] : memref<2xf32, #tpu.memory_space<smem>>
    %14 = vector.broadcast %13 : f32 to vector<16x1xf32>
    %15 = arith.addf %14, %12 : vector<16x1xf32>
    %c1 = arith.constant 1 : index
    %16 = memref.load %arg1[%c1] : memref<2xf32, #tpu.memory_space<smem>>
    %17 = math.log %8 : vector<16x1xf32>
    %18 = vector.broadcast %16 : f32 to vector<16x1xf32>
    %19 = arith.mulf %18, %17 : vector<16x1xf32>
    %20 = arith.subf %15, %19 : vector<16x1xf32>
    %c0_6 = arith.constant 0 : index
    %c0_7 = arith.constant 0 : index
    %21 = vector.load %arg4[%c0_6, %c0_7] : memref<16x1xf32, #tpu.memory_space<vmem>>, vector<16x1xf32>
    tpu.vector_store %arg4[%c0_6, %c0_7], %20 {strides = array<i32>} : memref<16x1xf32, #tpu.memory_space<vmem>>, vector<16x1xf32>,
    return
  }
  func.func @transform_0(%arg0: i32) -> i32 {
    %c0_i32 = arith.constant 0 : i32
    %c0_i32_0 = arith.constant 0 : i32
    return %c0_i32 : i32
  }
  func.func @transform_1(%arg0: i32) -> (i32, i32) {
    %c0_i32 = arith.constant 0 : i32
    %c0_i32_0 = arith.constant 0 : i32
    %c0_i32_1 = arith.constant 0 : i32
    return %c0_i32, %c0_i32_0 : i32, i32
  }
  func.func @transform_2(%arg0: i32) -> (i32, i32) {
    %c0_i32 = arith.constant 0 : i32
    %c0_i32_0 = arith.constant 0 : i32
    return %arg0, %c0_i32 : i32, i32
  }
  func.func @transform_3(%arg0: i32) -> (i32, i32) {
    %c0_i32 = arith.constant 0 : i32
    %c0_i32_0 = arith.constant 0 : i32
    return %arg0, %c0_i32 : i32, i32
  }
}

</mosaic_0001>

<llo_original>
// kernel: tpu_custom_call.1
$region0: #{tpu_custom_call.1}
  #allocation0 [shape = 'u32[]', space=smem, size = 0x4, offset = 0x4, fixed_abs, tag = 'smem constant byte address 0x4 - core index']
  #allocation1 [shape = 'u32[144,128]{1,0:T(1,128)}', space=vmem, size = 0x12000, scoped, tag = 'internal scratch']
  %s0 = inlined_call_operand.hbm [shape: f32[2], index: 0, kind: input, shape index: {}]
  %s1 = inlined_call_operand.vmem [shape: f32[1,32], index: 1, kind: input, shape index: {}]
  %s2 = inlined_call_operand.hbm [shape: f32[16,32], index: 2, kind: input, shape index: {}]
  %s3 = inlined_call_operand.vmem [shape: f32[16,1], index: 3, kind: output, shape index: {}]
  %s4 = sld [smem:[#allocation0]]
  $region30: #{tpu_custom_call.1} parent=0
    _
  %s6 = ssub.s32 1, %s4
  %s7 = scalar_select 0, %s6, %s4
  $region1: #{tpu_custom_call.1} parent=0
    #allocation2 [shape = 'u8[512]{0}', space=smem, size = 0x200, scoped, tag = 'input window, operand 0, single buffered']
    #allocation3 [shape = 's32[1]{0}', space=sflag, size = 0x4, scoped, tag = 'scoped memory for tpu_custom_call.1']
    #allocation4 [shape = 's32[1]{0}', space=sflag, size = 0x4, scoped, tag = 'scoped memory for tpu_custom_call.1']
    #allocation5 [shape = 'u8[8192]{0}', space=vmem, size = 0x2000, scoped, tag = 'input window, operand 2, single buffered']
    %8 = vsyncpa [#allocation4], 0
    %9 = vsyncpa [#allocation3], 0
    // Predicated region
    $region2: #{tpu_custom_call.1} parent=1 // pred_check
      _
    $region3: #{tpu_custom_call.1} parent=1 // pred_check_branch
      %11 = sbr.rel (0) target = $region5
    $region4: #{tpu_custom_call.1} parent=1 // pred_region
      %s13 = ssub.s32 16, 16
      %14 = vsyncadd [#allocation4], %s13
      %17 = dma.hbm_to_smem %s0, 16, [#allocation2], [#allocation4]
    $region5: #{tpu_custom_call.1} parent=1 // pred_fallthru
      _
    // Predicated region
    $region6: #{tpu_custom_call.1} parent=1 // pred_check
      _
    $region7: #{tpu_custom_call.1} parent=1 // pred_check_branch
      %19 = sbr.rel (0) target = $region9
    $region8: #{tpu_custom_call.1} parent=1 // pred_region
      _
    $region9: #{tpu_custom_call.1} parent=1 // pred_fallthru
      _
    // Predicated region
    $region10: #{tpu_custom_call.1} parent=1 // pred_check
      _
    $region11: #{tpu_custom_call.1} parent=1 // pred_check_branch
      %21 = sbr.rel (0) target = $region13
    $region12: #{tpu_custom_call.1} parent=1 // pred_region
      %s23 = ssub.s32 256, 256
      %24 = vsyncadd [#allocation3], %s23
      %s25 = sshll.u32 [#allocation5], 4
      %s26 = int_to_ptr.vmem [resolvable:$true] %s25
      %31 = dma.hbm_to_vmem [thread:$0]  %s2, 256, %s26, [#allocation3], 128, 128, 8
    $region13: #{tpu_custom_call.1} parent=1 // pred_fallthru
      _
    // Predicated region
    $region14: #{tpu_custom_call.1} parent=1 // pred_check
      _
    $region15: #{tpu_custom_call.1} parent=1 // pred_check_branch
      %33 = sbr.rel (0) target = $region17
    $region16: #{tpu_custom_call.1} parent=1 // pred_region
      %34 = dma.done [#allocation4], 16
    $region17: #{tpu_custom_call.1} parent=1 // pred_fallthru
      _
    // Predicated region
    $region18: #{tpu_custom_call.1} parent=1 // pred_check
      _
    $region19: #{tpu_custom_call.1} parent=1 // pred_check_branch
      %36 = sbr.rel (0) target = $region21
    $region20: #{tpu_custom_call.1} parent=1 // pred_region
      %37 = dma.done [#allocation3], 256
    $region21: #{tpu_custom_call.1} parent=1 // pred_fallthru
      _
    %38 = sfence
    %v39 = vld [vmem:[#allocation5] sm:$0xff]
    %v40 = vld [vmem:[#allocation5 + $0x8] sm:$0xff]
    %v41 = vld [vmem:[%s1] sm:$0x1]
    %vm42 = vcmask 261120
    %v43 = vsel %vm42, %v39, -inf
    %44 = vmax.xlane.f32.xlu0 %v43
    %v45 = vpop.xlane.xlu0 %44
    %v46 = vsel %vm42, %v40, -inf
    %47 = vmax.xlane.f32.xlu0 %v46
    %v48 = vpop.xlane.xlu0 %47
    %v49 = vsub.f32 %v39, %v45
    %v50 = vsub.f32 %v40, %v48
    %v51 = vmul.f32 %v49, 1.442695
    %v52 = vpow.pop %v51
    %v53 = vmul.f32 %v50, 1.442695
    %v54 = vpow.pop %v53
    %v55 = vsel %vm42, %v52, 0.0
    %56 = vadd.xlane.f32.xlu0 %v55
    %v57 = vpop.xlane.xlu0 %56
    %v58 = vsel %vm42, %v54, 0.0
    %59 = vadd.xlane.f32.xlu0 %v58
    %v60 = vpop.xlane.xlu0 %59
    %v62 = vlaneseq
    %v63 = vshrl.u32 %v62, 7
    %v64 = vsub.s32 0, %v63
    %v65 = vrot.slane %v41, %v64
    %v67 = vmul.f32 %v65, %v49
    %v68 = vmul.f32 %v65, %v50
    %v69 = vsel %vm42, %v67, 0.0
    %70 = vadd.xlane.f32.xlu0 %v69
    %v71 = vpop.xlane.xlu0 %70
    %v72 = vsel %vm42, %v68, 0.0
    %73 = vadd.xlane.f32.xlu0 %v72
    %v74 = vpop.xlane.xlu0 %73
    %s75 = sld [smem:[#allocation2]]
    %v76 = vstv %s75
    %v77 = vadd.f32 %v76, %v71
    %v78 = vadd.f32 %v76, %v74
    %s79 = sld [smem:[#allocation2 + $0x1]]
    %v80 = vlog2.pop %v57
    %v81 = vmul.f32 %v80, 0.6931472
    %v82 = vlog2.pop %v60
    %v83 = vmul.f32 %v82, 0.6931472
    %v84 = vstv %s79
    %v85 = vmul.f32 %v84, %v81
    %v86 = vmul.f32 %v84, %v83
    %v87 = vsub.f32 %v77, %v85
    %v88 = vsub.f32 %v78, %v86
    %vm89 = vcmask 7168
    %90 = vst.msk [vmem:[%s3] sm:$0xff] %vm89, %v87
    %91 = vst.msk [vmem:[%s3 + $0x8] sm:$0xff] %vm89, %v88
    // Predicated region
    $region22: #{tpu_custom_call.1} parent=1 // pred_check
      _
    $region23: #{tpu_custom_call.1} parent=1 // pred_check_branch
      %93 = sbr.rel (0) target = $region25
    $region24: #{tpu_custom_call.1} parent=1 // pred_region
      _
    $region25: #{tpu_custom_call.1} parent=1 // pred_fallthru
      _
    // Predicated region
    $region26: #{tpu_custom_call.1} parent=1 // pred_check
      _
    $region27: #{tpu_custom_call.1} parent=1 // pred_check_branch
      %95 = sbr.rel (0) target = $region29
    $region28: #{tpu_custom_call.1} parent=1 // pred_region
      _
    $region29: #{tpu_custom_call.1} parent=1 // pred_fallthru
      _
    %96 = vsyncpa [#allocation3], 1
    %97 = vsyncpa [#allocation4], 1

</llo_original>
